<compile_context>
chip_gen: v7x
topology: tpu7x:2x2x1
jax: 0.10.0
libtpu: 0.0.40
codegen_flags: <defaults>
</compile_context>

<pallas_src>
import jax
import jax.numpy as jnp
from jax.experimental import pallas as pl
from jax.experimental.pallas import tpu as pltpu


def _vmem_budget_bytes():
    """~75% of physical VMEM (headroom for Mosaic internal scratch)."""
    cap = None
    try:
        cap = getattr(pltpu.get_tpu_info(), "vmem_capacity_bytes", None)
    except Exception:
        cap = None
    if not cap:
        cap = 64 << 20  # conservative fallback (v7x physical capacity)
    return (int(cap) * 3) // 4


# ----------------------------- single-pass fused kernel -----------------------------

def _make_fused_kernel(n_parts, hw, out_dtype):
    inv_hw = 1.0 / float(hw)

    def kernel(*refs):
        part_refs = refs[:n_parts]        # each (1, Ci, HW), native dtype
        w1t_ref = refs[n_parts]           # (C, Cr) f32
        w2t_ref = refs[n_parts + 1]       # (Cr, C) f32
        o_ref = refs[n_parts + 2]         # (1, C, HW)

        # Fused channel concat in registers/VMEM (XLU) — avoids per-part masked stores.
        full = jnp.concatenate([pr[...] for pr in part_refs], axis=1)   # (1, C, HW)

        # Squeeze: global average pool, f32 lane accumulation (no f32 copy of the block).
        y = jnp.sum(full, axis=-1, dtype=jnp.float32) * inv_hw          # (1, C)

        # Excitation: fc1 + ReLU, fc2 + sigmoid (bias-free, matching the PyTorch module).
        h = jnp.maximum(
            jnp.dot(y, w1t_ref[...], preferred_element_type=jnp.float32), 0.0)   # (1, Cr)
        s = jax.nn.sigmoid(
            jnp.dot(h, w2t_ref[...], preferred_element_type=jnp.float32))        # (1, C)

        # Scale: f32 gate, single dense store, single downcast.
        o_ref[...] = (full * s[:, :, None]).astype(out_dtype)

    return kernel


def _single_pass(parts_flat, part_channels, w1t, w2t, out_dtype, hw, vmem_limit):
    B = parts_flat[0].shape[0]
    C = sum(part_channels)
    Cr = int(w1t.shape[1])
    n_parts = len(part_channels)

    in_bytes = sum(ci * hw * jnp.dtype(p.dtype).itemsize
                   for ci, p in zip(part_channels, parts_flat))
    out_bytes = C * hw * jnp.dtype(out_dtype).itemsize
    cost = pl.CostEstimate(
        flops=int(B * (3 * C * hw + 4 * C * Cr)),
        transcendentals=int(B * C),
        bytes_accessed=int(B * (in_bytes + out_bytes) + 2 * C * Cr * 4),
    )

    in_specs = [pl.BlockSpec((1, ci, hw), lambda b: (b, 0, 0)) for ci in part_channels]
    in_specs += [pl.BlockSpec((C, Cr), lambda b: (0, 0)),
                 pl.BlockSpec((Cr, C), lambda b: (0, 0))]

    # TODO(synk): if B == 1 on a 2-TensorCore chip (v7x), add a second parallel grid axis
    # (split HW) so both cores issue DMAs concurrently.
    return pl.pallas_call(
        _make_fused_kernel(n_parts, hw, out_dtype),
        out_shape=jax.ShapeDtypeStruct((B, C, hw), out_dtype),
        grid_spec=pltpu.PrefetchScalarGridSpec(
            num_scalar_prefetch=0,
            grid=(B,),
            in_specs=in_specs,
            out_specs=pl.BlockSpec((1, C, hw), lambda b: (b, 0, 0)),
        ),
        compiler_params=pltpu.CompilerParams(
            dimension_semantics=("parallel",),
            vmem_limit_bytes=vmem_limit,
        ),
        cost_estimate=cost,
    )(*parts_flat, w1t, w2t)


# ------------------------------ two-pass (HW-tiled) path ------------------------------

def _make_pool_kernel(n_parts, hw, hw_tile):
    need_mask = (hw % hw_tile) != 0

    def kernel(*refs):
        part_refs = refs[:n_parts]        # each (1, Ci, hw_tile)
        o_ref = refs[n_parts]             # (1, 1, C) f32 accumulator (resident across t)
        t = pl.program_id(1)

        @pl.when(t == 0)
        def _init():
            o_ref[...] = jnp.zeros_like(o_ref)

        full = jnp.concatenate([pr[...] for pr in part_refs], axis=1)   # (1, C, hw_tile)
        if need_mask:  # ragged last HW tile: exclude out-of-range lanes from the pool
            lane = jax.lax.broadcasted_iota(jnp.int32, (1, 1, hw_tile), 2) + t * hw_tile
            full = jnp.where(lane < hw, full, jnp.zeros_like(full))
        o_ref[...] += jnp.sum(full, axis=-1, dtype=jnp.float32)[:, None, :]

    return kernel


def _make_rescale_kernel(n_parts, out_dtype):
    def kernel(*refs):
        gate_ref = refs[0]                # (1, C, 1) f32
        part_refs = refs[1:1 + n_parts]   # each (1, Ci, hw_tile)
        o_ref = refs[1 + n_parts]         # (1, C, hw_tile)
        full = jnp.concatenate([pr[...] for pr in part_refs], axis=1)
        o_ref[...] = (full * gate_ref[...]).astype(out_dtype)
    return kernel


def _two_pass(parts_flat, part_channels, w1t, w2t, out_dtype, hw, hw_tile, vmem_limit):
    B = parts_flat[0].shape[0]
    C = sum(part_channels)
    n_parts = len(part_channels)
    n_t = pl.cdiv(hw, hw_tile)

    in_bytes = sum(ci * hw * jnp.dtype(p.dtype).itemsize
                   for ci, p in zip(part_channels, parts_flat))
    out_bytes = C * hw * jnp.dtype(out_dtype).itemsize

    # ---- Pass 1: per-batch pooled channel sums (f32 accumulator across HW tiles). ----
    pooled = pl.pallas_call(
        _make_pool_kernel(n_parts, hw, hw_tile),
        out_shape=jax.ShapeDtypeStruct((B, 1, C), jnp.float32),
        grid_spec=pltpu.PrefetchScalarGridSpec(
            num_scalar_prefetch=0,
            grid=(B, n_t),
            in_specs=[pl.BlockSpec((1, ci, hw_tile), lambda b, t: (b, 0, t))
                      for ci in part_channels],
            out_specs=pl.BlockSpec((1, 1, C), lambda b, t: (b, 0, 0)),
        ),
        compiler_params=pltpu.CompilerParams(
            dimension_semantics=("parallel", "arbitrary"),
            vmem_limit_bytes=vmem_limit,
        ),
        cost_estimate=pl.CostEstimate(
            flops=int(B * C * hw), transcendentals=0,
            bytes_accessed=int(B * in_bytes + B * C * 4)),
    )(*parts_flat)

    # ---- Tiny excitation MLP in plain JAX (negligible vs. the HBM streaming). ----
    y = pooled.reshape(B, C) * (1.0 / float(hw))
    h = jnp.maximum(jnp.dot(y, w1t), 0.0)
    gate = jax.nn.sigmoid(jnp.dot(h, w2t)).reshape(B, C, 1).astype(jnp.float32)

    # ---- Pass 2: re-stream HW tiles, rescale, write the concatenated output. ----
    return pl.pallas_call(
        _make_rescale_kernel(n_parts, out_dtype),
        out_shape=jax.ShapeDtypeStruct((B, C, hw), out_dtype),
        grid_spec=pltpu.PrefetchScalarGridSpec(
            num_scalar_prefetch=0,
            grid=(B, n_t),
            in_specs=[pl.BlockSpec((1, C, 1), lambda b, t: (b, 0, 0))] +
                     [pl.BlockSpec((1, ci, hw_tile), lambda b, t: (b, 0, t))
                      for ci in part_channels],
            out_specs=pl.BlockSpec((1, C, hw_tile), lambda b, t: (b, 0, t)),
        ),
        compiler_params=pltpu.CompilerParams(
            dimension_semantics=("parallel", "parallel"),
            vmem_limit_bytes=vmem_limit,
        ),
        cost_estimate=pl.CostEstimate(
            flops=int(B * C * hw), transcendentals=0,
            bytes_accessed=int(B * (in_bytes + out_bytes) + B * C * 4)),
    )(gate, *parts_flat)


# -------------------------------------- wrapper --------------------------------------

def concat_se_block(x, concat_list, w1, w2, *, hw_tile=None, force_two_pass=False):
    """x: (B, C0, H, W); concat_list: list of (B, Ci, H, W) (or a single array);
    w1: (Cr, C) fc1 weight (PyTorch Linear (out,in), bias=False);
    w2: (C, Cr) fc2 weight (bias=False)."""
    if isinstance(concat_list, (list, tuple)):
        parts = [x] + list(concat_list)
    else:
        parts = [x, concat_list]

    B, _, H, W = x.shape
    part_channels = tuple(int(p.shape[1]) for p in parts)
    C = sum(part_channels)
    HW = H * W
    out_dtype = jnp.result_type(*[p.dtype for p in parts])

    # Metadata-only flatten of the spatial dims; NO padding (full-extent / 128-multiple
    # tiles are used in the BlockSpecs instead).
    parts_flat = [p.reshape(B, p.shape[1], HW) for p in parts]

    Cr = int(w1.shape[0])
    w1t = jnp.asarray(w1, jnp.float32).T     # (C, Cr)
    w2t = jnp.asarray(w2, jnp.float32).T     # (Cr, C)

    budget = _vmem_budget_bytes()
    out_isz = jnp.dtype(out_dtype).itemsize
    in_block_bytes = sum(ci * HW * jnp.dtype(p.dtype).itemsize
                         for ci, p in zip(part_channels, parts))
    out_block_bytes = C * HW * out_isz
    # Per-batch single-pass footprint: double-buffered in+out blocks, concat temp,
    # f32 product temp, weights, slack.
    single_need = (2 * (in_block_bytes + out_block_bytes) + in_block_bytes
                   + C * HW * 4 + 2 * C * Cr * 4 + (2 << 20))

    use_single = (not force_two_pass
                  and single_need <= budget
                  # keep per-step blocks modest so grid=(B,) still pipelines decently
                  and (in_block_bytes + out_block_bytes) <= (16 << 20))

    if use_single:
        vmem_limit = int(min(budget, max(single_need, 32 << 20)))
        y = _single_pass(parts_flat, part_channels, w1t, w2t, out_dtype, HW, vmem_limit)
    else:
        if hw_tile is None:
            if HW <= 1024:
                hw_tile = HW
            else:
                bytes_per_lane = (sum(ci * jnp.dtype(p.dtype).itemsize
                                      for ci, p in zip(part_channels, parts))
                                  + C * out_isz)
                max_lanes = max(512, budget // (4 * max(bytes_per_lane, 1)))
                hw_tile = min(4096, (max_lanes // 128) * 128)
                if hw_tile >= HW:
                    hw_tile = HW
        hw_tile = int(hw_tile)
        if hw_tile < HW:
            assert hw_tile % 128 == 0, "hw_tile must be a multiple of 128 (or full HW)"
        # TODO(synk): if a single HW-tile column (C * hw_tile) still exceeds VMEM
        # (extremely large C), add channel tiling on top of the HW tiling.
        in_tile_bytes = sum(ci * hw_tile * jnp.dtype(p.dtype).itemsize
                            for ci, p in zip(part_channels, parts))
        out_tile_bytes = C * hw_tile * out_isz
        tile_need = (2 * (in_tile_bytes + out_tile_bytes) + in_tile_bytes
                     + C * hw_tile * 4 + (2 << 20))
        vmem_limit = int(min(budget, max(tile_need, 32 << 20)))
        y = _two_pass(parts_flat, part_channels, w1t, w2t, out_dtype, HW, hw_tile,
                      vmem_limit)

    return y.reshape(B, C, H, W)


# ------------------------------------- reference -------------------------------------

def _reference(x, concat_list, w1, w2):
    parts = [x] + list(concat_list) if isinstance(concat_list, (list, tuple)) \
        else [x, concat_list]
    out = jnp.concatenate(parts, axis=1)
    b, c, _, _ = out.shape
    y = jnp.mean(out, axis=(2, 3))                       # (B, C)
    y = jnp.maximum(y @ w1.T, 0.0)                       # fc1 + ReLU (bias-free)
    y = jax.nn.sigmoid(y @ w2.T)                         # fc2 + Sigmoid (bias-free)
    return out * y.reshape(b, c, 1, 1)


if __name__ == "__main__":
    key = jax.random.PRNGKey(0)
    k_x, k_c1, k_c2, k_w1, k_w2 = jax.random.split(key, 5)

    B, H, W = 2, 16, 16
    C0 = 4
    concat_channels = (4, 4)
    C = C0 + sum(concat_channels)        # 12 channels after concat
    reduction = 6
    Cr = C // reduction                  # 2

    x = jax.random.normal(k_x, (B, C0, H, W), dtype=jnp.float32)
    concat_list = [
        jax.random.normal(k_c1, (B, concat_channels[0], H, W), dtype=jnp.float32),
        jax.random.normal(k_c2, (B, concat_channels[1], H, W), dtype=jnp.float32),
    ]
    # PyTorch Linear weight layout (out, in), bias=False as in the module.
    w1 = jax.random.normal(k_w1, (Cr, C), dtype=jnp.float32) * 0.3   # fc1: C -> Cr
    w2 = jax.random.normal(k_w2, (C, Cr), dtype=jnp.float32) * 0.3   # fc2: Cr -> C

    ref = _reference(x, concat_list, w1, w2)

    # Default (single-pass fused) path.
    out = jax.block_until_ready(concat_se_block(x, concat_list, w1, w2))
    assert out.shape == (B, C, H, W)
    assert jnp.allclose(out, ref, atol=1e-5, rtol=1e-5), "single-pass mismatch vs reference"

    # Also exercise the two-pass HW-tiled path (used automatically when the per-batch
    # block exceeds the VMEM budget, e.g. v7x at production shapes).
    out2 = jax.block_until_ready(
        concat_se_block(x, concat_list, w1, w2, force_two_pass=True, hw_tile=128))
    assert jnp.allclose(out2, ref, atol=1e-5, rtol=1e-5), "two-pass mismatch vs reference"

    print("KERNEL_OK")
</pallas_src>

<mosaic_0001>
module attributes {stable_mosaic.version = 11 : i64} {
  func.func @kernel(%arg0: i32, %arg1: memref<1x4x256xf32, #tpu.memory_space<vmem>>, %arg2: memref<1x4x256xf32, #tpu.memory_space<vmem>>, %arg3: memref<1x4x256xf32, #tpu.memory_space<vmem>>, %arg4: memref<12x2xf32, #tpu.memory_space<vmem>>, %arg5: memref<2x12xf32, #tpu.memory_space<vmem>>, %arg6: memref<1x12x256xf32, #tpu.memory_space<vmem>>) attributes {dimension_semantics = [#tpu.dimension_semantics<parallel>], iteration_bounds = array<i64: 2>, scalar_prefetch = 0 : i64, scratch_operands = 0 : i64, tpu.core_type = #tpu.core_type<tc>, window_params = [{transform_indices = @transform_0, window_bounds = array<i64: 1, 4, 256>}, {transform_indices = @transform_1, window_bounds = array<i64: 1, 4, 256>}, {transform_indices = @transform_2, window_bounds = array<i64: 1, 4, 256>}, {pipeline_mode = #tpu.pipeline_mode<synchronous>, transform_indices = @transform_3, window_bounds = array<i64: 12, 2>}, {pipeline_mode = #tpu.pipeline_mode<synchronous>, transform_indices = @transform_4, window_bounds = array<i64: 2, 12>}, {transform_indices = @transform_5, window_bounds = array<i64: 1, 12, 256>}]} {
    %c0 = arith.constant 0 : index
    %c0_0 = arith.constant 0 : index
    %c0_1 = arith.constant 0 : index
    %0 = vector.load %arg1[%c0, %c0_0, %c0_1] : memref<1x4x256xf32, #tpu.memory_space<vmem>>, vector<1x4x256xf32>
    %c0_2 = arith.constant 0 : index
    %c0_3 = arith.constant 0 : index
    %c0_4 = arith.constant 0 : index
    %1 = vector.load %arg2[%c0_2, %c0_3, %c0_4] : memref<1x4x256xf32, #tpu.memory_space<vmem>>, vector<1x4x256xf32>
    %c0_5 = arith.constant 0 : index
    %c0_6 = arith.constant 0 : index
    %c0_7 = arith.constant 0 : index
    %2 = vector.load %arg3[%c0_5, %c0_6, %c0_7] : memref<1x4x256xf32, #tpu.memory_space<vmem>>, vector<1x4x256xf32>
    %3 = tpu.concatenate %0, %1, %2 in 1 : vector<1x4x256xf32>, vector<1x4x256xf32>, vector<1x4x256xf32> -> vector<1x12x256xf32>
    %cst = arith.constant dense<0.000000e+00> : vector<1x12xf32>
    %4 = vector.multi_reduction <add>, %3, %cst [2] : vector<1x12x256xf32> to vector<1x12xf32>
    %cst_8 = arith.constant 3.906250e-03 : f32
    %5 = vector.broadcast %cst_8 : f32 to vector<1x12xf32>
    %6 = arith.mulf %4, %5 : vector<1x12xf32>
    %c0_9 = arith.constant 0 : index
    %c0_10 = arith.constant 0 : index
    %7 = vector.load %arg4[%c0_9, %c0_10] : memref<12x2xf32, #tpu.memory_space<vmem>>, vector<12x2xf32>
    %cst_11 = arith.constant dense<0.000000e+00> : vector<1x2xf32>
    %8 = tpu.matmul %6, %7, %cst_11 {dimension_numbers = #tpu.dot_dimension_numbers<[1], [0], [0], [1], [0, 0, 1, 1], [], []>} : vector<1x12xf32>, vector<12x2xf32>, vector<1x2xf32> -> vector<1x2xf32>
    %cst_12 = arith.constant 0.000000e+00 : f32
    %9 = vector.broadcast %cst_12 : f32 to vector<1x2xf32>
    %10 = arith.maximumf %8, %9 : vector<1x2xf32>
    %c0_13 = arith.constant 0 : index
    %c0_14 = arith.constant 0 : index
    %11 = vector.load %arg5[%c0_13, %c0_14] : memref<2x12xf32, #tpu.memory_space<vmem>>, vector<2x12xf32>
    %cst_15 = arith.constant dense<0.000000e+00> : vector<1x12xf32>
    %12 = tpu.matmul %10, %11, %cst_15 {dimension_numbers = #tpu.dot_dimension_numbers<[1], [0], [0], [1], [0, 0, 1, 1], [], []>} : vector<1x2xf32>, vector<2x12xf32>, vector<1x12xf32> -> vector<1x12xf32>
    %13 = arith.negf %12 : vector<1x12xf32>
    %14 = math.exp %13 : vector<1x12xf32>
    %cst_16 = arith.constant 1.000000e+00 : f32
    %15 = vector.broadcast %cst_16 : f32 to vector<1x12xf32>
    %16 = arith.addf %15, %14 : vector<1x12xf32>
    %17 = arith.divf %15, %16 : vector<1x12xf32>
    %18 = vector.shape_cast %17 : vector<1x12xf32> to vector<1x12x1xf32>
    %19 = vector.broadcast %18 : vector<1x12x1xf32> to vector<1x12x256xf32>
    %20 = arith.mulf %3, %19 : vector<1x12x256xf32>
    %c0_17 = arith.constant 0 : index
    %c0_18 = arith.constant 0 : index
    %c0_19 = arith.constant 0 : index
    %21 = vector.load %arg6[%c0_17, %c0_18, %c0_19] : memref<1x12x256xf32, #tpu.memory_space<vmem>>, vector<1x12x256xf32>
    tpu.vector_store %arg6[%c0_17, %c0_18, %c0_19], %20 {strides = array<i32>} : memref<1x12x256xf32, #tpu.memory_space<vmem>>, vector<1x12x256xf32>,
    return
  }
  func.func @transform_0(%arg0: i32) -> (i32, i32, i32) {
    %c0_i32 = arith.constant 0 : i32
    %c0_i32_0 = arith.constant 0 : i32
    %c0_i32_1 = arith.constant 0 : i32
    return %arg0, %c0_i32, %c0_i32_0 : i32, i32, i32
  }
  func.func @transform_1(%arg0: i32) -> (i32, i32, i32) {
    %c0_i32 = arith.constant 0 : i32
    %c0_i32_0 = arith.constant 0 : i32
    %c0_i32_1 = arith.constant 0 : i32
    return %arg0, %c0_i32, %c0_i32_0 : i32, i32, i32
  }
  func.func @transform_2(%arg0: i32) -> (i32, i32, i32) {
    %c0_i32 = arith.constant 0 : i32
    %c0_i32_0 = arith.constant 0 : i32
    %c0_i32_1 = arith.constant 0 : i32
    return %arg0, %c0_i32, %c0_i32_0 : i32, i32, i32
  }
  func.func @transform_3(%arg0: i32) -> (i32, i32) {
    %c0_i32 = arith.constant 0 : i32
    %c0_i32_0 = arith.constant 0 : i32
    %c0_i32_1 = arith.constant 0 : i32
    return %c0_i32, %c0_i32_0 : i32, i32
  }
  func.func @transform_4(%arg0: i32) -> (i32, i32) {
    %c0_i32 = arith.constant 0 : i32
    %c0_i32_0 = arith.constant 0 : i32
    %c0_i32_1 = arith.constant 0 : i32
    return %c0_i32, %c0_i32_0 : i32, i32
  }
  func.func @transform_5(%arg0: i32) -> (i32, i32, i32) {
    %c0_i32 = arith.constant 0 : i32
    %c0_i32_0 = arith.constant 0 : i32
    %c0_i32_1 = arith.constant 0 : i32
    return %arg0, %c0_i32, %c0_i32_0 : i32, i32, i32
  }
}

</mosaic_0001>

<llo_original>
// kernel: tpu_custom_call.1
$region0: #{tpu_custom_call.1}
  #allocation0 [shape = 'u32[]', space=smem, size = 0x4, offset = 0x4, fixed_abs, tag = 'smem constant byte address 0x4 - core index']
  #allocation1 [shape = 'u32[144,128]{1,0:T(1,128)}', space=vmem, size = 0x12000, scoped, tag = 'internal scratch']
  %s0 = inlined_call_operand.vmem [shape: f32[2,4,256], index: 0, kind: input, shape index: {}]
  %s1 = inlined_call_operand.hbm [shape: f32[2,4,256], index: 1, kind: input, shape index: {}]
  %s2 = inlined_call_operand.hbm [shape: f32[2,4,256], index: 2, kind: input, shape index: {}]
  %s3 = inlined_call_operand.vmem [shape: f32[12,2], index: 3, kind: input, shape index: {}]
  %s4 = inlined_call_operand.vmem [shape: f32[2,12], index: 4, kind: input, shape index: {}]
  %s5 = inlined_call_operand.vmem [shape: f32[2,12,256], index: 5, kind: output, shape index: {}]
  %s6 = sld [smem:[#allocation0]]
  $region61: #{tpu_custom_call.1} parent=0
    _
  %s8 = ssub.s32 1, %s6
  %s9 = scalar_select 0, %s8, %s6
  $region1: #{tpu_custom_call.1} parent=0
    #allocation2 [shape = 'u8[8192]{0}', space=vmem, size = 0x2000, scoped, tag = 'input window, operand 1']
    #allocation3 [shape = 's32[2]{0}', space=sflag, size = 0x8, scoped, tag = 'scoped memory for tpu_custom_call.1']
    #allocation4 [shape = 'u8[8192]{0}', space=vmem, size = 0x2000, scoped, tag = 'input window, operand 2']
    #allocation5 [shape = 's32[2]{0}', space=sflag, size = 0x8, scoped, tag = 'scoped memory for tpu_custom_call.1']
    %10 = vsyncpa [#allocation3], 0
    %s11 = scalar_lea.sflag [#allocation3], 1
    %12 = vsyncpa %s11, 0
    %13 = vsyncpa [#allocation5], 0
    %s14 = scalar_lea.sflag [#allocation5], 1
    %15 = vsyncpa %s14, 0
    loop: start=0, step=1, limit=4
    $region2: #{tpu_custom_call.1} parent=1 // loop_pre_header
      _
    $region3: #{tpu_custom_call.1} parent=1 // loop_header
      %s17 = sphi 0, %s21
      %p18 = scmp.ge.s32.totalorder %s17, 4
      %s27 = sphi 0, %s29
      %s30 = sphi 0, %s27
      %s31 = sphi 0, %s30
      %s47 = sphi 0, %s31
      %s53 = sphi 0, %s55
      %s56 = sphi 0, %s53
      %s57 = sphi 0, %s56
      %s73 = sphi 0, %s57
      %s79 = sphi 0, %s81
      %s82 = sphi 0, %s79
      %s83 = sphi 0, %s82
      %s99 = sphi 0, %s83
      %s103 = sphi 0, %s103
      %s105 = sphi 0, %s103
      %s106 = sphi 0, %s105
      %s120 = sphi 0, %s106
      %s124 = sphi 0, %s124
      %s126 = sphi 0, %s124
      %s127 = sphi 0, %s126
      %s141 = sphi 0, %s127
      %s147 = sphi 0, %s149
      %s150 = sphi 0, %s147
      %s151 = sphi 0, %s150
      %s167 = sphi 0, %s151
    $region4: #{tpu_custom_call.1} parent=1 // loop_header_branch
      %20 = sbr.rel (%p18) target = $region8
    $region5: #{tpu_custom_call.1} parent=1 // loop_body
      %s22 = ssub.s32 %s17, 1
      %s23 = ssub.s32 %s17, 2
      %s24 = sadd.s32 %s17, 1
      %s25 = ssub.s32 %s17, %s24
      %p26 = scmp.eq.s32.totalorder %s25, 0
      %s28 = sadd.s32 %s27, 1
      %s29 = scalar_select %p26, %s27, %s28
      %p32 = pneg %p26
      %p33 = scmp.eq.s32.totalorder %s17, 1
      %p34 = por %p32, %p33
      %p35 = scmp.ne.s32.totalorder %s27, %s30
      %p36 = scmp.eq.s32.totalorder %s17, 0
      %p37 = por %p35, %p36
      %p38 = scmp.ne.s32.totalorder %s27, %s30
      %p39 = scmp.eq.s32.totalorder %s22, 1
      %p40 = por %p38, %p39
      %p41 = scmp.ne.s32.totalorder %s30, %s31
      %p42 = scmp.eq.s32.totalorder %s22, 0
      %p43 = por %p41, %p42
      %p44 = scmp.ne.s32.totalorder %s30, %s31
      %p45 = scmp.eq.s32.totalorder %s23, 1
      %p46 = por %p44, %p45
      %p48 = scmp.ne.s32.totalorder %s31, %s47
      %p49 = scmp.eq.s32.totalorder %s23, 0
      %p50 = por %p48, %p49
      %s51 = ssub.s32 %s17, %s24
      %p52 = scmp.eq.s32.totalorder %s51, 0
      %s54 = sadd.s32 %s53, 1
      %s55 = scalar_select %p52, %s53, %s54
      %p58 = pneg %p52
      %p59 = scmp.eq.s32.totalorder %s17, 1
      %p60 = por %p58, %p59
      %p61 = scmp.ne.s32.totalorder %s53, %s56
      %p62 = scmp.eq.s32.totalorder %s17, 0
      %p63 = por %p61, %p62
      %p64 = scmp.ne.s32.totalorder %s53, %s56
      %p65 = scmp.eq.s32.totalorder %s22, 1
      %p66 = por %p64, %p65
      %p67 = scmp.ne.s32.totalorder %s56, %s57
      %p68 = scmp.eq.s32.totalorder %s22, 0
      %p69 = por %p67, %p68
      %p70 = scmp.ne.s32.totalorder %s56, %s57
      %p71 = scmp.eq.s32.totalorder %s23, 1
      %p72 = por %p70, %p71
      %p74 = scmp.ne.s32.totalorder %s57, %s73
      %p75 = scmp.eq.s32.totalorder %s23, 0
      %p76 = por %p74, %p75
      %s77 = ssub.s32 %s17, %s24
      %p78 = scmp.eq.s32.totalorder %s77, 0
      %s80 = sadd.s32 %s79, 1
      %s81 = scalar_select %p78, %s79, %s80
      %p84 = pneg %p78
      %p85 = scmp.eq.s32.totalorder %s17, 1
      %p86 = por %p84, %p85
      %p87 = scmp.ne.s32.totalorder %s79, %s82
      %p88 = scmp.eq.s32.totalorder %s17, 0
      %p89 = por %p87, %p88
      %p90 = scmp.ne.s32.totalorder %s79, %s82
      %p91 = scmp.eq.s32.totalorder %s22, 1
      %p92 = por %p90, %p91
      %p93 = scmp.ne.s32.totalorder %s82, %s83
      %p94 = scmp.eq.s32.totalorder %s22, 0
      %p95 = por %p93, %p94
      %p96 = scmp.ne.s32.totalorder %s82, %s83
      %p97 = scmp.eq.s32.totalorder %s23, 1
      %p98 = por %p96, %p97
      %p100 = scmp.ne.s32.totalorder %s83, %s99
      %p101 = scmp.eq.s32.totalorder %s23, 0
      %p102 = por %p100, %p101
      %s104 = sadd.s32 %s103, 1
      %p107 = scmp.eq.s32.totalorder %s17, 1
      %p108 = scmp.ne.s32.totalorder %s103, %s105
      %p109 = scmp.eq.s32.totalorder %s17, 0
      %p110 = por %p108, %p109
      %p111 = scmp.ne.s32.totalorder %s103, %s105
      %p112 = scmp.eq.s32.totalorder %s22, 1
      %p113 = por %p111, %p112
      %p114 = scmp.ne.s32.totalorder %s105, %s106
      %p115 = scmp.eq.s32.totalorder %s22, 0
      %p116 = por %p114, %p115
      %p117 = scmp.ne.s32.totalorder %s105, %s106
      %p118 = scmp.eq.s32.totalorder %s23, 1
      %p119 = por %p117, %p118
      %p121 = scmp.ne.s32.totalorder %s106, %s120
      %p122 = scmp.eq.s32.totalorder %s23, 0
      %p123 = por %p121, %p122
      %s125 = sadd.s32 %s124, 1
      %p128 = scmp.eq.s32.totalorder %s17, 1
      %p129 = scmp.ne.s32.totalorder %s124, %s126
      %p130 = scmp.eq.s32.totalorder %s17, 0
      %p131 = por %p129, %p130
      %p132 = scmp.ne.s32.totalorder %s124, %s126
      %p133 = scmp.eq.s32.totalorder %s22, 1
      %p134 = por %p132, %p133
      %p135 = scmp.ne.s32.totalorder %s126, %s127
      %p136 = scmp.eq.s32.totalorder %s22, 0
      %p137 = por %p135, %p136
      %p138 = scmp.ne.s32.totalorder %s126, %s127
      %p139 = scmp.eq.s32.totalorder %s23, 1
      %p140 = por %p138, %p139
      %p142 = scmp.ne.s32.totalorder %s127, %s141
      %p143 = scmp.eq.s32.totalorder %s23, 0
      %p144 = por %p142, %p143
      %s145 = ssub.s32 %s17, %s24
      %p146 = scmp.eq.s32.totalorder %s145, 0
      %s148 = sadd.s32 %s147, 1
      %s149 = scalar_select %p146, %s147, %s148
      %p152 = pneg %p146
      %p153 = scmp.eq.s32.totalorder %s17, 1
      %p154 = por %p152, %p153
      %p155 = scmp.ne.s32.totalorder %s147, %s150
      %p156 = scmp.eq.s32.totalorder %s17, 0
      %p157 = por %p155, %p156
      %p158 = scmp.ne.s32.totalorder %s147, %s150
      %p159 = scmp.eq.s32.totalorder %s22, 1
      %p160 = por %p158, %p159
      %p161 = scmp.ne.s32.totalorder %s150, %s151
      %p162 = scmp.eq.s32.totalorder %s22, 0
      %p163 = por %p161, %p162
      %p164 = scmp.ne.s32.totalorder %s150, %s151
      %p165 = scmp.eq.s32.totalorder %s23, 1
      %p166 = por %p164, %p165
      %p168 = scmp.ne.s32.totalorder %s151, %s167
      %p169 = scmp.eq.s32.totalorder %s23, 0
      %p170 = por %p168, %p169
      %p171 = scmp.le.s32.totalorder 1, %s17
      %p172 = scmp.lt.s32.totalorder %s17, 3
      %p173 = pnand %p171, %p172
      %p174 = pneg %p173
      // Predicated region
      $region9: #{tpu_custom_call.1} parent=5 // pred_check
        _
      $region10: #{tpu_custom_call.1} parent=5 // pred_check_branch
        %176 = sbr.rel (%p173) target = $region12
      $region11: #{tpu_custom_call.1} parent=5 // pred_region
        %s177 = ssub.s32 %s17, 1
        // Predicated region
        $region13: #{tpu_custom_call.1} parent=11 // pred_check
          %p178 = pneg %p116
        $region14: #{tpu_custom_call.1} parent=11 // pred_check_branch
          %180 = sbr.rel (%p178) target = $region16
        $region15: #{tpu_custom_call.1} parent=11 // pred_region
          _
        $region16: #{tpu_custom_call.1} parent=11 // pred_fallthru
          _
        // Predicated region
        $region17: #{tpu_custom_call.1} parent=11 // pred_check
          %p181 = pneg %p137
        $region18: #{tpu_custom_call.1} parent=11 // pred_check_branch
          %183 = sbr.rel (%p181) target = $region20
        $region19: #{tpu_custom_call.1} parent=11 // pred_region
          _
        $region20: #{tpu_custom_call.1} parent=11 // pred_fallthru
          _
      $region12: #{tpu_custom_call.1} parent=5 // pred_fallthru
        _
      %p184 = scmp.lt.s32.totalorder %s17, 2
      // Predicated region
      $region21: #{tpu_custom_call.1} parent=5 // pred_check
        %p185 = pneg %p184
      $region22: #{tpu_custom_call.1} parent=5 // pred_check_branch
        %187 = sbr.rel (%p185) target = $region24
      $region23: #{tpu_custom_call.1} parent=5 // pred_region
        // Predicated region
        $region25: #{tpu_custom_call.1} parent=23 // pred_check
          %p188 = pneg %p37
        $region26: #{tpu_custom_call.1} parent=23 // pred_check_branch
          %190 = sbr.rel (%p188) target = $region28
        $region27: #{tpu_custom_call.1} parent=23 // pred_region
          %p191 = scmp.lt.s32.totalorder %s17, 1
          %s192 = scalar_select %p191, %s17, 1
          %s193 = smul.addr %s192, 2
          %s194 = smul.addr %s193, 4
          %s195 = scalar_lea.vmem %s0, %s194
        $region28: #{tpu_custom_call.1} parent=23 // pred_fallthru
          _
        // Predicated region
        $region29: #{tpu_custom_call.1} parent=23 // pred_check
          %p196 = pneg %p63
        $region30: #{tpu_custom_call.1} parent=23 // pred_check_branch
          %198 = sbr.rel (%p196) target = $region32
        $region31: #{tpu_custom_call.1} parent=23 // pred_region
          %s199 = sand.u32 %s53, 1
          %s200 = scalar_lea.sflag [#allocation3], %s199
          %s201 = sand.u32 %s53, 1
          %s202 = smul.addr %s201, 8
          %s203 = scalar_lea.vmem [#allocation2], %s202
          %s205 = ssub.s32 128, 128
          %206 = vsyncadd %s200, %s205
          %s207 = smul.addr %s17, 2
          %s208 = smul.addr %s207, 64
          %s209 = scalar_lea.hbm %s1, %s208
          %s211 = sshll.u32 %s203, 4
          %s212 = int_to_ptr.vmem [resolvable:$true] %s211
          %214 = dma.hbm_to_vmem [thread:$0]  %s209, 128, %s212, %s200
        $region32: #{tpu_custom_call.1} parent=23 // pred_fallthru
          _
        // Predicated region
        $region33: #{tpu_custom_call.1} parent=23 // pred_check
          %p215 = pneg %p89
        $region34: #{tpu_custom_call.1} parent=23 // pred_check_branch
          %217 = sbr.rel (%p215) target = $region36
        $region35: #{tpu_custom_call.1} parent=23 // pred_region
          %s218 = sand.u32 %s79, 1
          %s219 = scalar_lea.sflag [#allocation5], %s218
          %s220 = sand.u32 %s79, 1
          %s221 = smul.addr %s220, 8
          %s222 = scalar_lea.vmem [#allocation4], %s221
          %s224 = ssub.s32 128, 128
          %225 = vsyncadd %s219, %s224
          %s226 = smul.addr %s17, 2
          %s227 = smul.addr %s226, 64
          %s228 = scalar_lea.hbm %s2, %s227
          %s230 = sshll.u32 %s222, 4
          %s231 = int_to_ptr.vmem [resolvable:$true] %s230
          %233 = dma.hbm_to_vmem [thread:$0]  %s228, 128, %s231, %s219
        $region36: #{tpu_custom_call.1} parent=23 // pred_fallthru
          _
      $region24: #{tpu_custom_call.1} parent=5 // pred_fallthru
        _
      %p234 = scmp.le.s32.totalorder 1, %s17
      %p235 = scmp.lt.s32.totalorder %s17, 3
      %p236 = pnand %p234, %p235
      %p237 = pneg %p236
      // Predicated region
      $region37: #{tpu_custom_call.1} parent=5 // pred_check
        _
      $region38: #{tpu_custom_call.1} parent=5 // pred_check_branch
        %239 = sbr.rel (%p236) target = $region40
      $region39: #{tpu_custom_call.1} parent=5 // pred_region
        %s240 = ssub.s32 %s17, 1
        %s241 = sand.u32 %s56, 1
        %s242 = scalar_lea.sflag [#allocation3], %s241
        %s243 = sand.u32 %s56, 1
        %s244 = smul.addr %s243, 8
        %s245 = scalar_lea.vmem [#allocation2], %s244
        // Predicated region
        $region41: #{tpu_custom_call.1} parent=39 // pred_check
          %p246 = pneg %p69
        $region42: #{tpu_custom_call.1} parent=39 // pred_check_branch
          %248 = sbr.rel (%p246) target = $region44
        $region43: #{tpu_custom_call.1} parent=39 // pred_region
          %249 = dma.done %s242, 128
        $region44: #{tpu_custom_call.1} parent=39 // pred_fallthru
          _
        %s250 = sand.u32 %s82, 1
        %s251 = scalar_lea.sflag [#allocation5], %s250
        %s252 = sand.u32 %s82, 1
        %s253 = smul.addr %s252, 8
        %s254 = scalar_lea.vmem [#allocation4], %s253
        // Predicated region
        $region45: #{tpu_custom_call.1} parent=39 // pred_check
          %p255 = pneg %p95
        $region46: #{tpu_custom_call.1} parent=39 // pred_check_branch
          %257 = sbr.rel (%p255) target = $region48
        $region47: #{tpu_custom_call.1} parent=39 // pred_region
          %258 = dma.done %s251, 128
        $region48: #{tpu_custom_call.1} parent=39 // pred_fallthru
          _
        %p259 = scmp.lt.s32.totalorder %s22, 1
        %s260 = scalar_select %p259, %s22, 1
        %s261 = smul.addr %s260, 2
        %s262 = smul.addr %s261, 4
        %s263 = scalar_lea.vmem %s0, %s262
        %p264 = pneg %p43
        %p265 = pneg %p40
        %s266 = sand.u32 %s56, 1
        %s267 = scalar_lea.sflag [#allocation3], %s266
        %s268 = sand.u32 %s56, 1
        %s269 = smul.addr %s268, 8
        %s270 = scalar_lea.vmem [#allocation2], %s269
        %p271 = pneg %p69
        %p272 = pneg %p66
        %s273 = sand.u32 %s82, 1
        %s274 = scalar_lea.sflag [#allocation5], %s273
        %s275 = sand.u32 %s82, 1
        %s276 = smul.addr %s275, 8
        %s277 = scalar_lea.vmem [#allocation4], %s276
        %p278 = pneg %p95
        %p279 = pneg %p92
        %p280 = pneg %p116
        %p281 = pneg %p113
        %p282 = pneg %p137
        %p283 = pneg %p134
        %p284 = pneg %p163
        %p285 = pneg %p160
        %p286 = scmp.lt.s32.totalorder %s22, 1
        %s287 = scalar_select %p286, %s22, 1
        %s288 = smul.addr %s287, 4
        %s289 = smul.addr %s288, 8
        %s290 = scalar_lea.vmem %s5, %s289
        %p291 = scmp.lt.s32.totalorder %s22, 1
        %s292 = scalar_select %p291, %s22, 1
        %s293 = smul.addr %s292, 2
        %s294 = smul.addr %s293, 4
        %s295 = scalar_lea.vmem %s0, %s294
        %p296 = scmp.lt.s32.totalorder %s22, 1
        %s297 = scalar_select %p296, %s22, 1
        %s298 = smul.addr %s297, 4
        %s299 = smul.addr %s298, 8
        %s300 = scalar_lea.vmem %s5, %s299
        %v301 = vld [vmem:[%s295] sm:$0xff]
        %v302 = vld [vmem:[%s245] sm:$0xff]
        %v303 = vld [vmem:[%s254] sm:$0xff]
        %v305 = vcombine.high %v301, %v301
        %v308 = vcombine.low %v302, %v302
        %v311 = vcombine.high %v303, %v303
        %vm313 = vcmask 1043456
        %v314 = vsel %vm313, %v301, %v308
        %v315 = vsel %vm313, %v305, %v302
        %v316 = vadd.f32 %v314, %v315
        %317 = vadd.xlane.f32.xlu0 %v316
        %v318 = vpop.xlane.xlu0 %317
        %v319 = vsel %vm313, %v303, 0.0
        %v320 = vsel %vm313, %v311, 0.0
        %v321 = vadd.f32 %v319, %v320
        %322 = vadd.xlane.f32.xlu0 %v321
        %v323 = vpop.xlane.xlu0 %322
        %v324 = vmul.f32 %v318, 0.00390625
        %v325 = vmul.f32 %v323, 0.00390625
        %v326 = vld [vmem:[%s3] sm:$0xff]
        %v327 = vld [vmem:[%s3 + $0x8] sm:$0xf]
        %v330 = vlaneseq
        %v331 = vand.u32 %v330, 127
        %v332 = vlaneseq
        %v333 = vshrl.u32 %v332, 7
        %v334 = vsub.s32 %v331, %v333
        %v335 = vrot.slane %v324, %v334
        %v336 = vadd.s32 %v331, 4294967288
        %v337 = vlaneseq
        %v338 = vshrl.u32 %v337, 7
        %v339 = vsub.s32 %v336, %v338
        %v340 = vrot.slane %v325, %v339
        %vm341 = vcmask 130112
        %v342 = vsel %vm341, %v340, %v335
        %vm343 = vcmask 97280
        %v344 = vsel %vm343, %v342, 0
        %v347 = vsel %vm313, %v327, 0
        %349 = vmatprep.subr.mxu0 0.0
        %350 = vmatpush1.msra.mxu0 %v326
        %351 = vmatprep.subr.mxu0 0.0
        %352 = vmatpush1.msra.mxu0 %v347
        %353 = vmatprep.subr.mxu0 0.0
        %354 = vmatpush1.msra.mxu0 0.0
        %355 = vmatprep.subr.mxu0 0.0
        %356 = vmatpush1.msra.mxu0 0.0
        %357 = vmatprep.subr.mxu0 0.0
        %358 = vmatpush1.msra.mxu0 0.0
        %359 = vmatprep.subr.mxu0 0.0
        %360 = vmatpush1.msra.mxu0 0.0
        %361 = vmatprep.subr.mxu0 0.0
        %362 = vmatpush1.msra.mxu0 0.0
        %363 = vmatprep.subr.mxu0 0.0
        %364 = vmatpush1.msra.mxu0 0.0
        %365 = vmatprep.subr.mxu0 0.0
        %366 = vmatpush1.msra.mxu0 0.0
        %367 = vmatprep.subr.mxu0 0.0
        %368 = vmatpush1.msra.mxu0 0.0
        %369 = vmatprep.subr.mxu0 0.0
        %370 = vmatpush1.msra.mxu0 0.0
        %371 = vmatprep.subr.mxu0 0.0
        %372 = vmatpush1.msra.mxu0 0.0
        %373 = vmatprep.subr.mxu0 0.0
        %374 = vmatpush1.msra.mxu0 0.0
        %375 = vmatprep.subr.mxu0 0.0
        %376 = vmatpush1.msra.mxu0 0.0
        %377 = vmatprep.subr.mxu0 0.0
        %378 = vmatpush1.msra.mxu0 0.0
        %379 = vmatprep.subr.mxu0 0.0
        %380 = vmatpush1.msra.mxu0 0.0
        %381 = vmatprep.subr.mxu0 0.0
        %382 = vmatpush1.msra.mxu0 0.0
        %383 = vmatprep.subr.mxu0 0.0
        %384 = vmatpush1.msra.mxu0 0.0
        %385 = vmatprep.subr.mxu0 0.0
        %386 = vmatpush1.msra.mxu0 0.0
        %387 = vmatprep.subr.mxu0 0.0
        %388 = vmatpush1.msra.mxu0 0.0
        %389 = vmatprep.subr.mxu0 0.0
        %390 = vmatpush1.msra.mxu0 0.0
        %391 = vmatprep.subr.mxu0 0.0
        %392 = vmatpush1.msra.mxu0 0.0
        %393 = vmatprep.subr.mxu0 0.0
        %394 = vmatpush1.msra.mxu0 0.0
        %395 = vmatprep.subr.mxu0 0.0
        %396 = vmatpush1.msra.mxu0 0.0
        %397 = vmatprep.subr.mxu0 0.0
        %398 = vmatpush1.msra.mxu0 0.0
        %399 = vmatprep.subr.mxu0 0.0
        %400 = vmatpush1.msra.mxu0 0.0
        %401 = vmatprep.subr.mxu0 0.0
        %402 = vmatpush1.msra.mxu0 0.0
        %403 = vmatprep.subr.mxu0 0.0
        %404 = vmatpush1.msra.mxu0 0.0
        %405 = vmatprep.subr.mxu0 0.0
        %406 = vmatpush1.msra.mxu0 0.0
        %407 = vmatprep.subr.mxu0 0.0
        %408 = vmatpush1.msra.mxu0 0.0
        %409 = vmatprep.subr.mxu0 0.0
        %410 = vmatpush1.msra.mxu0 0.0
        %411 = vmatprep.subr.mxu0 0.0
        %412 = vmatpush1.msra.mxu0 0.0
        %413 = vmatprep.mubr.f32.mxu0 0.0
        %414 = vmatmul.mubr.f32.gmra.mrb[0].mxu0 %v344
        %v415 = vpop.f32.mrb[0].mxu0
        %v416 = vadd.f32 0.0, %v415
        %v417 = vpop.f32.mrb[0].mxu0
        %418 = vdwg.mxu0
        %v419 = vmax.f32 %v416, 0.0
        %v420 = vld [vmem:[%s4] sm:$0x3]
        %vm421 = vcmask 15360
        %v423 = vsel %vm421, %v419, 0
        %vm425 = vcmask 1041408
        %v427 = vsel %vm425, %v420, 0
        %429 = vmatprep.subr.mxu0 0.0
        %430 = vmatpush1.msra.mxu0 %v427
        %431 = vmatprep.subr.mxu0 0.0
        %432 = vmatpush1.msra.mxu0 0.0
        %433 = vmatprep.subr.mxu0 0.0
        %434 = vmatpush1.msra.mxu0 0.0
        %435 = vmatprep.subr.mxu0 0.0
        %436 = vmatpush1.msra.mxu0 0.0
        %437 = vmatprep.subr.mxu0 0.0
        %438 = vmatpush1.msra.mxu0 0.0
        %439 = vmatprep.subr.mxu0 0.0
        %440 = vmatpush1.msra.mxu0 0.0
        %441 = vmatprep.subr.mxu0 0.0
        %442 = vmatpush1.msra.mxu0 0.0
        %443 = vmatprep.subr.mxu0 0.0
        %444 = vmatpush1.msra.mxu0 0.0
        %445 = vmatprep.subr.mxu0 0.0
        %446 = vmatpush1.msra.mxu0 0.0
        %447 = vmatprep.subr.mxu0 0.0
        %448 = vmatpush1.msra.mxu0 0.0
        %449 = vmatprep.subr.mxu0 0.0
        %450 = vmatpush1.msra.mxu0 0.0
        %451 = vmatprep.subr.mxu0 0.0
        %452 = vmatpush1.msra.mxu0 0.0
        %453 = vmatprep.subr.mxu0 0.0
        %454 = vmatpush1.msra.mxu0 0.0
        %455 = vmatprep.subr.mxu0 0.0
        %456 = vmatpush1.msra.mxu0 0.0
        %457 = vmatprep.subr.mxu0 0.0
        %458 = vmatpush1.msra.mxu0 0.0
        %459 = vmatprep.subr.mxu0 0.0
        %460 = vmatpush1.msra.mxu0 0.0
        %461 = vmatprep.subr.mxu0 0.0
        %462 = vmatpush1.msra.mxu0 0.0
        %463 = vmatprep.subr.mxu0 0.0
        %464 = vmatpush1.msra.mxu0 0.0
        %465 = vmatprep.subr.mxu0 0.0
        %466 = vmatpush1.msra.mxu0 0.0
        %467 = vmatprep.subr.mxu0 0.0
        %468 = vmatpush1.msra.mxu0 0.0
        %469 = vmatprep.subr.mxu0 0.0
        %470 = vmatpush1.msra.mxu0 0.0
        %471 = vmatprep.subr.mxu0 0.0
        %472 = vmatpush1.msra.mxu0 0.0
        %473 = vmatprep.subr.mxu0 0.0
        %474 = vmatpush1.msra.mxu0 0.0
        %475 = vmatprep.subr.mxu0 0.0
        %476 = vmatpush1.msra.mxu0 0.0
        %477 = vmatprep.subr.mxu0 0.0
        %478 = vmatpush1.msra.mxu0 0.0
        %479 = vmatprep.subr.mxu0 0.0
        %480 = vmatpush1.msra.mxu0 0.0
        %481 = vmatprep.subr.mxu0 0.0
        %482 = vmatpush1.msra.mxu0 0.0
        %483 = vmatprep.subr.mxu0 0.0
        %484 = vmatpush1.msra.mxu0 0.0
        %485 = vmatprep.subr.mxu0 0.0
        %486 = vmatpush1.msra.mxu0 0.0
        %487 = vmatprep.subr.mxu0 0.0
        %488 = vmatpush1.msra.mxu0 0.0
        %489 = vmatprep.subr.mxu0 0.0
        %490 = vmatpush1.msra.mxu0 0.0
        %491 = vmatprep.subr.mxu0 0.0
        %492 = vmatpush1.msra.mxu0 0.0
        %493 = vmatprep.mubr.f32.mxu0 0.0
        %494 = vmatmul.mubr.f32.gmra.mrb[0].mxu0 %v423
        %v495 = vpop.f32.mrb[0].mxu0
        %v496 = vadd.f32 0.0, %v495
        %v497 = vpop.f32.mrb[0].mxu0
        %498 = vdwg.mxu0
        %v499 = vxor.u32 %v496, 2147483648
        %v500 = vmul.f32 %v499, 1.442695
        %v501 = vpow.pop %v500
        %v502 = vadd.f32 %v501, 1.0
        %v503 = vrcp.pop %v502
        %v504 = vmul.f32 1.0, %v503
        %v505 = vlaneseq
        %v506 = vshrl.u32 %v505, 7
        %v507 = vsub.s32 0, %v506
        %v508 = vrot.slane %v504, %v507
        %510 = vbcast.lane.b32.xlu0 %v508, 256
        %v511 = vpop.permute.xlu0 %510
        %s513 = sor.u32 256, 8
        %514 = vbcast.lane.b32.xlu0 %v508, %s513
        %v515 = vpop.permute.xlu0 %514
        %v516 = vmul.f32 %v314, %v511
        %v517 = vmul.f32 %v315, %v511
        %v518 = vmul.f32 %v303, %v515
        %v519 = vmul.f32 %v311, %v515
        %520 = vst [vmem:[%s300] sm:$0xff] %v516
        %521 = vst [vmem:[%s300 + $0x8] sm:$0xff] %v517
        %522 = vst [vmem:[%s300 + $0x10] sm:$0xf] %v518
        %523 = vst [vmem:[%s300 + $0x18] sm:$0xf] %v519
        %p524 = scmp.lt.s32.totalorder %s22, 1
        %s525 = scalar_select %p524, %s22, 1
        %s526 = smul.addr %s525, 4
        %s527 = smul.addr %s526, 8
        %s528 = scalar_lea.vmem %s5, %s527
        // Predicated region
        $region49: #{tpu_custom_call.1} parent=39 // pred_check
          %p529 = pneg %p160
        $region50: #{tpu_custom_call.1} parent=39 // pred_check_branch
          %531 = sbr.rel (%p529) target = $region52
        $region51: #{tpu_custom_call.1} parent=39 // pred_region
          _
        $region52: #{tpu_custom_call.1} parent=39 // pred_fallthru
          _
      $region40: #{tpu_custom_call.1} parent=5 // pred_fallthru
        _
      %p532 = scmp.le.s32.totalorder 2, %s17
      // Predicated region
      $region53: #{tpu_custom_call.1} parent=5 // pred_check
        %p533 = pneg %p532
      $region54: #{tpu_custom_call.1} parent=5 // pred_check_branch
        %535 = sbr.rel (%p533) target = $region56
      $region55: #{tpu_custom_call.1} parent=5 // pred_region
        %s536 = ssub.s32 %s17, 2
        // Predicated region
        $region57: #{tpu_custom_call.1} parent=55 // pred_check
          %p537 = pneg %p166
        $region58: #{tpu_custom_call.1} parent=55 // pred_check_branch
          %539 = sbr.rel (%p537) target = $region60
        $region59: #{tpu_custom_call.1} parent=55 // pred_region
          %p540 = scmp.lt.s32.totalorder %s23, 1
          %s541 = scalar_select %p540, %s23, 1
          %s542 = smul.addr %s541, 4
          %s543 = smul.addr %s542, 8
          %s544 = scalar_lea.vmem %s5, %s543
        $region60: #{tpu_custom_call.1} parent=55 // pred_fallthru
          _
      $region56: #{tpu_custom_call.1} parent=5 // pred_fallthru
        _
    $region6: #{tpu_custom_call.1} parent=1 // loop_footer
      %s21 = sadd.s32 1, %s17
    $region7: #{tpu_custom_call.1} parent=1 // loop_footer_branch
      %16 = sbr.rel target = $region3
    $region8: #{tpu_custom_call.1} parent=1 // loop_exit
      _
    %545 = vsyncpa [#allocation3], 1
    %s546 = scalar_lea.sflag [#allocation3], 1
    %547 = vsyncpa %s546, 1
    %548 = vsyncpa [#allocation5], 1
    %s549 = scalar_lea.sflag [#allocation5], 1
    %550 = vsyncpa %s549, 1

</llo_original>
